<compile_context>
chip_gen: v6e
topology: v6e:2x2x1
jax: 0.10.0
libtpu: 0.0.40
codegen_flags: <defaults>
</compile_context>

<pallas_src>
import functools

import jax
import jax.numpy as jnp
from jax.experimental import pallas as pl
from jax.experimental.pallas import tpu as pltpu


def _ffn_kernel(x_ref, w1_ref, b1_ref, w2_ref, b2_ref, o_ref, acc_ref):
    # x_ref  : (TM, d_model)   bf16 row tile (constant across k)
    # w1_ref : (d_model, TK)   bf16 k-th d_ff slice of W1
    # b1_ref : (1, TK)         f32  k-th d_ff slice of b1
    # w2_ref : (TK, d_model)   bf16 k-th d_ff slice of W2
    # b2_ref : (1, d_model)    f32
    # o_ref  : (TM, d_model)   output tile (written on last k step)
    # acc_ref: (TM, d_model)   f32 accumulator, resident across the k axis
    k = pl.program_id(1)

    @pl.when(k == 0)
    def _init():
        acc_ref[...] = jnp.zeros_like(acc_ref)

    # First matmul (MXU, f32 accumulation). ReLU is elementwise along d_ff so
    # it can be applied per slice.
    h = jnp.dot(x_ref[...], w1_ref[...], preferred_element_type=jnp.float32)
    h = jnp.maximum(h + b1_ref[...], 0.0)
    # TODO(synk): training-mode dropout (pltpu.prng_seed / prng_random_bits +
    # 1/(1-p) scaling) omitted; eval-mode dropout is the identity.

    # Second matmul consumes this d_ff slice immediately (bf16 in, f32 acc).
    acc_ref[...] += jnp.dot(h.astype(w2_ref.dtype), w2_ref[...],
                            preferred_element_type=jnp.float32)

    @pl.when(k == pl.num_programs(1) - 1)
    def _finalize():
        o_ref[...] = (acc_ref[...] + b2_ref[...]).astype(o_ref.dtype)


def _vmem_estimate_bytes(tm, d_model, tk, out_itemsize):
    bf16, f32 = 2, 4
    x_tiles = 2 * tm * d_model * bf16          # double-buffered x
    w1 = 2 * d_model * tk * bf16               # double-buffered W1 slice
    w2 = 2 * tk * d_model * bf16               # double-buffered W2 slice
    b1 = 2 * 8 * max(tk, 128) * f32            # (8,128)-padded bias tiles
    b2 = 2 * 8 * max(d_model, 128) * f32
    out = 2 * tm * d_model * out_itemsize      # double-buffered output
    acc = tm * d_model * f32                   # accumulator scratch
    h = tm * tk * f32                          # intermediate working set
    return x_tiles + w1 + w2 + b1 + b2 + out + acc + h


@functools.partial(jax.jit, static_argnames=("block_rows", "block_ff"))
def positionwise_feed_forward(x, w1, b1, w2, b2, *, block_rows=256, block_ff=512):
    """x: (..., d_model) -> (..., d_model).  Weights stored (in, out)."""
    orig_shape = x.shape
    out_dtype = x.dtype
    d_model = orig_shape[-1]
    d_ff = w1.shape[1]

    x2d = x.reshape(-1, d_model)
    n_rows = x2d.shape[0]

    # Row tiling: pad tokens to a multiple of the row tile (no tiny-tile fallback).
    tm = int(block_rows)
    n_row_blocks = pl.cdiv(n_rows, tm)
    padded_rows = n_row_blocks * tm
    if padded_rows != n_rows:
        x2d = jnp.pad(x2d, ((0, padded_rows - n_rows), (0, 0)))

    # d_ff reduction tiling: slices must be lane-aligned (128) or the full axis.
    tk = int(block_ff)
    if d_ff % tk != 0 or (tk % 128 != 0 and tk != d_ff):
        tk = d_ff
    n_k_blocks = d_ff // tk

    # bf16 matmul operands (cast once, outside the kernel); f32 biases.
    xb = x2d.astype(jnp.bfloat16)
    w1b = w1.astype(jnp.bfloat16)
    w2b = w2.astype(jnp.bfloat16)
    b1_2d = b1.reshape(1, d_ff).astype(jnp.float32)
    b2_2d = b2.reshape(1, d_model).astype(jnp.float32)

    vmem_limit = int(min(max(2 * _vmem_estimate_bytes(
        tm, d_model, tk, jnp.dtype(out_dtype).itemsize),
        32 * 1024 * 1024), 56 * 1024 * 1024))

    grid = (n_row_blocks, n_k_blocks)

    out = pl.pallas_call(
        _ffn_kernel,
        out_shape=jax.ShapeDtypeStruct((padded_rows, d_model), out_dtype),
        grid_spec=pltpu.PrefetchScalarGridSpec(
            num_scalar_prefetch=0,
            grid=grid,
            in_specs=[
                pl.BlockSpec((tm, d_model), lambda i, k: (i, 0)),   # x row tile
                pl.BlockSpec((d_model, tk), lambda i, k: (0, k)),   # W1 slice
                pl.BlockSpec((1, tk),       lambda i, k: (0, k)),   # b1 slice
                pl.BlockSpec((tk, d_model), lambda i, k: (k, 0)),   # W2 slice
                pl.BlockSpec((1, d_model),  lambda i, k: (0, 0)),   # b2
            ],
            out_specs=pl.BlockSpec((tm, d_model), lambda i, k: (i, 0)),
            scratch_shapes=[pltpu.VMEM((tm, d_model), jnp.float32)],
        ),
        compiler_params=pltpu.CompilerParams(
            dimension_semantics=("parallel", "arbitrary"),
            vmem_limit_bytes=vmem_limit,
        ),
    )(xb, w1b, b1_2d, w2b, b2_2d)

    if padded_rows != n_rows:
        out = out[:n_rows]
    return out.reshape(orig_shape)


def init_params(key, d_model, d_ff, dtype=jnp.float32):
    """Deterministic init mimicking nn.Linear defaults (uniform ±1/sqrt(fan_in))."""
    k1, k2, k3, k4 = jax.random.split(key, 4)
    lim1 = 1.0 / (d_model ** 0.5)
    lim2 = 1.0 / (d_ff ** 0.5)
    # Stored as (in_features, out_features) so kernel computes x @ W + b.
    w1 = jax.random.uniform(k1, (d_model, d_ff), dtype, -lim1, lim1)
    b1 = jax.random.uniform(k2, (d_ff,), dtype, -lim1, lim1)
    w2 = jax.random.uniform(k3, (d_ff, d_model), dtype, -lim2, lim2)
    b2 = jax.random.uniform(k4, (d_model,), dtype, -lim2, lim2)
    return w1, b1, w2, b2


if __name__ == "__main__":
    key = jax.random.PRNGKey(0)
    # Small but lane-aligned feature dims (>=128) so the MXU/vreg paths are real.
    batch, seq, d_model, d_ff = 2, 72, 128, 256

    kx, kp = jax.random.split(key)
    x = jax.random.normal(kx, (batch, seq, d_model), jnp.float32)
    w1, b1, w2, b2 = init_params(kp, d_model, d_ff)

    # (a) multi-step grid: 144 rows padded to 256 (2 row tiles) x 2 d_ff slices.
    out_tiled = positionwise_feed_forward(x, w1, b1, w2, b2,
                                          block_rows=128, block_ff=128)
    # (b) default large-tile path (single grid step here).
    out_default = positionwise_feed_forward(x, w1, b1, w2, b2)
    out_tiled, out_default = jax.block_until_ready((out_tiled, out_default))

    # Mixed-precision reference mirroring the kernel (bf16 operands, f32 acc).
    xb = x.reshape(-1, d_model).astype(jnp.bfloat16)
    h = jnp.dot(xb, w1.astype(jnp.bfloat16),
                preferred_element_type=jnp.float32) + b1
    h = jnp.maximum(h, 0.0)
    ref = jnp.dot(h.astype(jnp.bfloat16), w2.astype(jnp.bfloat16),
                  preferred_element_type=jnp.float32) + b2
    ref = ref.reshape(x.shape)

    assert out_tiled.shape == x.shape and out_default.shape == x.shape
    assert jnp.allclose(out_tiled, ref, atol=2e-2, rtol=2e-2), \
        float(jnp.max(jnp.abs(out_tiled - ref)))
    assert jnp.allclose(out_default, ref, atol=2e-2, rtol=2e-2), \
        float(jnp.max(jnp.abs(out_default - ref)))

    print("KERNEL_OK")
</pallas_src>

<mosaic_0001>
module attributes {stable_mosaic.version = 11 : i64} {
  func.func @_ffn_kernel(%arg0: i32, %arg1: i32, %arg2: memref<128x128xbf16, #tpu.memory_space<vmem>>, %arg3: memref<128x128xbf16, #tpu.memory_space<vmem>>, %arg4: memref<1x128xf32, #tpu.memory_space<vmem>>, %arg5: memref<128x128xbf16, #tpu.memory_space<vmem>>, %arg6: memref<1x128xf32, #tpu.memory_space<vmem>>, %arg7: memref<128x128xf32, #tpu.memory_space<vmem>>, %arg8: memref<128x128xf32, #tpu.memory_space<vmem>>) attributes {dimension_semantics = [#tpu.dimension_semantics<parallel>, #tpu.dimension_semantics<arbitrary>], iteration_bounds = array<i64: 2, 2>, scalar_prefetch = 0 : i64, scratch_operands = 1 : i64, tpu.core_type = #tpu.core_type<tc>, window_params = [{transform_indices = @transform_0, window_bounds = array<i64: 128, 128>}, {transform_indices = @transform_1, window_bounds = array<i64: 128, 128>}, {transform_indices = @transform_2, window_bounds = array<i64: 1, 128>}, {transform_indices = @transform_3, window_bounds = array<i64: 128, 128>}, {pipeline_mode = #tpu.pipeline_mode<synchronous>, transform_indices = @transform_4, window_bounds = array<i64: 1, 128>}, {transform_indices = @transform_5, window_bounds = array<i64: 128, 128>}]} {
    %c0_i32 = arith.constant 0 : i32
    %0 = arith.cmpi eq, %arg1, %c0_i32 : i32
    %1 = arith.extui %0 : i1 to i32
    %c0_i32_0 = arith.constant 0 : i32
    %2 = arith.cmpi ne, %1, %c0_i32_0 : i32
    scf.if %2 {
      %cst_15 = arith.constant 0.000000e+00 : f32
      %20 = vector.broadcast %cst_15 : f32 to vector<128x128xf32>
      %c0_16 = arith.constant 0 : index
      %c0_17 = arith.constant 0 : index
      %21 = vector.load %arg8[%c0_16, %c0_17] : memref<128x128xf32, #tpu.memory_space<vmem>>, vector<128x128xf32>
      tpu.vector_store %arg8[%c0_16, %c0_17], %20 {strides = array<i32>} : memref<128x128xf32, #tpu.memory_space<vmem>>, vector<128x128xf32>,
    } else {
    }
    %c0 = arith.constant 0 : index
    %c0_1 = arith.constant 0 : index
    %3 = vector.load %arg2[%c0, %c0_1] : memref<128x128xbf16, #tpu.memory_space<vmem>>, vector<128x128xbf16>
    %c0_2 = arith.constant 0 : index
    %c0_3 = arith.constant 0 : index
    %4 = vector.load %arg3[%c0_2, %c0_3] : memref<128x128xbf16, #tpu.memory_space<vmem>>, vector<128x128xbf16>
    %cst = arith.constant dense<0.000000e+00> : vector<128x128xf32>
    %5 = tpu.matmul %3, %4, %cst {dimension_numbers = #tpu.dot_dimension_numbers<[1], [0], [0], [1], [0, 0, 1, 1], [], []>} : vector<128x128xbf16>, vector<128x128xbf16>, vector<128x128xf32> -> vector<128x128xf32>
    %c0_4 = arith.constant 0 : index
    %c0_5 = arith.constant 0 : index
    %6 = vector.load %arg4[%c0_4, %c0_5] : memref<1x128xf32, #tpu.memory_space<vmem>>, vector<1x128xf32>
    %7 = vector.broadcast %6 : vector<1x128xf32> to vector<128x128xf32>
    %8 = arith.addf %5, %7 : vector<128x128xf32>
    %cst_6 = arith.constant 0.000000e+00 : f32
    %9 = vector.broadcast %cst_6 : f32 to vector<128x128xf32>
    %10 = arith.maximumf %8, %9 : vector<128x128xf32>
    %c0_7 = arith.constant 0 : index
    %c0_8 = arith.constant 0 : index
    %11 = vector.load %arg8[%c0_7, %c0_8] : memref<128x128xf32, #tpu.memory_space<vmem>>, vector<128x128xf32>
    %12 = arith.truncf %10 : vector<128x128xf32> to vector<128x128xbf16>
    %c0_9 = arith.constant 0 : index
    %c0_10 = arith.constant 0 : index
    %13 = vector.load %arg5[%c0_9, %c0_10] : memref<128x128xbf16, #tpu.memory_space<vmem>>, vector<128x128xbf16>
    %cst_11 = arith.constant dense<0.000000e+00> : vector<128x128xf32>
    %14 = tpu.matmul %12, %13, %cst_11 {dimension_numbers = #tpu.dot_dimension_numbers<[1], [0], [0], [1], [0, 0, 1, 1], [], []>} : vector<128x128xbf16>, vector<128x128xbf16>, vector<128x128xf32> -> vector<128x128xf32>
    %15 = arith.addf %11, %14 : vector<128x128xf32>
    %c0_12 = arith.constant 0 : index
    %c0_13 = arith.constant 0 : index
    %16 = vector.load %arg8[%c0_12, %c0_13] : memref<128x128xf32, #tpu.memory_space<vmem>>, vector<128x128xf32>
    tpu.vector_store %arg8[%c0_12, %c0_13], %15 {strides = array<i32>} : memref<128x128xf32, #tpu.memory_space<vmem>>, vector<128x128xf32>,
    %c1_i32 = arith.constant 1 : i32
    %17 = arith.cmpi eq, %arg1, %c1_i32 : i32
    %18 = arith.extui %17 : i1 to i32
    %c0_i32_14 = arith.constant 0 : i32
    %19 = arith.cmpi ne, %18, %c0_i32_14 : i32
    scf.if %19 {
      %c0_15 = arith.constant 0 : index
      %c0_16 = arith.constant 0 : index
      %20 = vector.load %arg8[%c0_15, %c0_16] : memref<128x128xf32, #tpu.memory_space<vmem>>, vector<128x128xf32>
      %c0_17 = arith.constant 0 : index
      %c0_18 = arith.constant 0 : index
      %21 = vector.load %arg6[%c0_17, %c0_18] : memref<1x128xf32, #tpu.memory_space<vmem>>, vector<1x128xf32>
      %22 = vector.broadcast %21 : vector<1x128xf32> to vector<128x128xf32>
      %23 = arith.addf %20, %22 : vector<128x128xf32>
      %c0_19 = arith.constant 0 : index
      %c0_20 = arith.constant 0 : index
      %24 = vector.load %arg7[%c0_19, %c0_20] : memref<128x128xf32, #tpu.memory_space<vmem>>, vector<128x128xf32>
      tpu.vector_store %arg7[%c0_19, %c0_20], %23 {strides = array<i32>} : memref<128x128xf32, #tpu.memory_space<vmem>>, vector<128x128xf32>,
    } else {
    }
    return
  }
  func.func @transform_0(%arg0: i32, %arg1: i32) -> (i32, i32) {
    %c0_i32 = arith.constant 0 : i32
    %c0_i32_0 = arith.constant 0 : i32
    return %arg0, %c0_i32 : i32, i32
  }
  func.func @transform_1(%arg0: i32, %arg1: i32) -> (i32, i32) {
    %c0_i32 = arith.constant 0 : i32
    %c0_i32_0 = arith.constant 0 : i32
    return %c0_i32, %arg1 : i32, i32
  }
  func.func @transform_2(%arg0: i32, %arg1: i32) -> (i32, i32) {
    %c0_i32 = arith.constant 0 : i32
    %c0_i32_0 = arith.constant 0 : i32
    return %c0_i32, %arg1 : i32, i32
  }
  func.func @transform_3(%arg0: i32, %arg1: i32) -> (i32, i32) {
    %c0_i32 = arith.constant 0 : i32
    %c0_i32_0 = arith.constant 0 : i32
    return %arg1, %c0_i32 : i32, i32
  }
  func.func @transform_4(%arg0: i32, %arg1: i32) -> (i32, i32) {
    %c0_i32 = arith.constant 0 : i32
    %c0_i32_0 = arith.constant 0 : i32
    %c0_i32_1 = arith.constant 0 : i32
    return %c0_i32, %c0_i32_0 : i32, i32
  }
  func.func @transform_5(%arg0: i32, %arg1: i32) -> (i32, i32) {
    %c0_i32 = arith.constant 0 : i32
    %c0_i32_0 = arith.constant 0 : i32
    return %arg0, %c0_i32 : i32, i32
  }
}

</mosaic_0001>

<llo_original>
// kernel: positionwise_feed_forward.1
$region0: #{positionwise_feed_forward.1}
  #allocation0 [shape = 'u32[]', space=smem, size = 0x4, offset = 0x4, fixed_abs, tag = 'smem constant byte address 0x4 - core index']
  #allocation1 [shape = 'u32[144,128]{1,0:T(1,128)}', space=vmem, size = 0x12000, scoped, tag = 'internal scratch']
  #allocation2 [shape = 'f32[128,128]{1,0:T(8,128)}', space=vmem, size = 0x10000, scoped, tag = 'scratch operand']
  %s0 = inlined_call_operand.vmem [shape: bf16[256,128], index: 0, kind: input, shape index: {}]
  %s1 = inlined_call_operand.vmem [shape: bf16[128,256], index: 1, kind: input, shape index: {}]
  %s2 = inlined_call_operand.vmem [shape: f32[1,256], index: 2, kind: input, shape index: {}]
  %s3 = inlined_call_operand.vmem [shape: bf16[256,128], index: 3, kind: input, shape index: {}]
  %s4 = inlined_call_operand.vmem [shape: f32[1,128], index: 4, kind: input, shape index: {}]
  %s5 = inlined_call_operand.vmem [shape: f32[256,128], index: 5, kind: output, shape index: {}]
  %s6 = sld [smem:[#allocation0]]
  $region102: #{positionwise_feed_forward.1} parent=0
    _
  %s8 = ssub.s32 1, %s6
  %s9 = scalar_select 0, %s8, %s6
  $region1: #{positionwise_feed_forward.1} parent=0
    #allocation3 [shape = 'u8[65536]{0}', space=vmem, size = 0x10000, scoped, tag = 'input window, operand 1']
    loop: start=0, step=1, limit=6
    $region2: #{positionwise_feed_forward.1} parent=1 // loop_pre_header
      _
    $region3: #{positionwise_feed_forward.1} parent=1 // loop_header
      %s11 = sphi 0, %s15
      %p12 = scmp.ge.s32.totalorder %s11, 6
      %s18 = sphi 0, %s30
      %s19 = sphi 0, %s26
      %s20 = sphi 0, %s18
      %s21 = sphi 0, %s19
      %s22 = sphi 0, %s20
      %s23 = sphi 0, %s21
      %s33 = sphi 0, %s35
      %s36 = sphi 0, %s33
      %s37 = sphi 0, %s36
      %s53 = sphi 0, %s37
      %s59 = sphi 0, %s61
      %s62 = sphi 0, %s59
      %s63 = sphi 0, %s62
      %s79 = sphi 0, %s63
      %s85 = sphi 0, %s87
      %s88 = sphi 0, %s85
      %s89 = sphi 0, %s88
      %s105 = sphi 0, %s89
      %s111 = sphi 0, %s113
      %s114 = sphi 0, %s111
      %s115 = sphi 0, %s114
      %s131 = sphi 0, %s115
      %s135 = sphi 0, %s135
      %s137 = sphi 0, %s135
      %s138 = sphi 0, %s137
      %s152 = sphi 0, %s138
      %s158 = sphi 0, %s160
      %s161 = sphi 0, %s158
      %s162 = sphi 0, %s161
      %s178 = sphi 0, %s162
    $region4: #{positionwise_feed_forward.1} parent=1 // loop_header_branch
      %14 = sbr.rel (%p12) target = $region8
    $region5: #{positionwise_feed_forward.1} parent=1 // loop_body
      %s16 = ssub.s32 %s11, 1
      %s17 = ssub.s32 %s11, 2
      %s24 = sadd.s32 1, %s19
      %p25 = scmp.ge.s32.totalorder %s24, 2
      %s26 = scalar_select %p25, 0, %s24
      %s27 = sadd.s32 1, %s18
      %s28 = scalar_select %p25, %s27, %s18
      %p29 = scmp.ge.s32.totalorder %s28, 2
      %s30 = scalar_select %p29, 0, %s28
      %s31 = ssub.s32 %s18, %s30
      %p32 = scmp.eq.s32.totalorder %s31, 0
      %s34 = sadd.s32 %s33, 1
      %s35 = scalar_select %p32, %s33, %s34
      %p38 = pneg %p32
      %p39 = scmp.eq.s32.totalorder %s11, 3
      %p40 = por %p38, %p39
      %p41 = scmp.ne.s32.totalorder %s33, %s36
      %p42 = scmp.eq.s32.totalorder %s11, 0
      %p43 = por %p41, %p42
      %p44 = scmp.ne.s32.totalorder %s33, %s36
      %p45 = scmp.eq.s32.totalorder %s16, 3
      %p46 = por %p44, %p45
      %p47 = scmp.ne.s32.totalorder %s36, %s37
      %p48 = scmp.eq.s32.totalorder %s16, 0
      %p49 = por %p47, %p48
      %p50 = scmp.ne.s32.totalorder %s36, %s37
      %p51 = scmp.eq.s32.totalorder %s17, 3
      %p52 = por %p50, %p51
      %p54 = scmp.ne.s32.totalorder %s37, %s53
      %p55 = scmp.eq.s32.totalorder %s17, 0
      %p56 = por %p54, %p55
      %s57 = ssub.s32 %s19, %s26
      %p58 = scmp.eq.s32.totalorder %s57, 0
      %s60 = sadd.s32 %s59, 1
      %s61 = scalar_select %p58, %s59, %s60
      %p64 = pneg %p58
      %p65 = scmp.eq.s32.totalorder %s11, 3
      %p66 = por %p64, %p65
      %p67 = scmp.ne.s32.totalorder %s59, %s62
      %p68 = scmp.eq.s32.totalorder %s11, 0
      %p69 = por %p67, %p68
      %p70 = scmp.ne.s32.totalorder %s59, %s62
      %p71 = scmp.eq.s32.totalorder %s16, 3
      %p72 = por %p70, %p71
      %p73 = scmp.ne.s32.totalorder %s62, %s63
      %p74 = scmp.eq.s32.totalorder %s16, 0
      %p75 = por %p73, %p74
      %p76 = scmp.ne.s32.totalorder %s62, %s63
      %p77 = scmp.eq.s32.totalorder %s17, 3
      %p78 = por %p76, %p77
      %p80 = scmp.ne.s32.totalorder %s63, %s79
      %p81 = scmp.eq.s32.totalorder %s17, 0
      %p82 = por %p80, %p81
      %s83 = ssub.s32 %s19, %s26
      %p84 = scmp.eq.s32.totalorder %s83, 0
      %s86 = sadd.s32 %s85, 1
      %s87 = scalar_select %p84, %s85, %s86
      %p90 = pneg %p84
      %p91 = scmp.eq.s32.totalorder %s11, 3
      %p92 = por %p90, %p91
      %p93 = scmp.ne.s32.totalorder %s85, %s88
      %p94 = scmp.eq.s32.totalorder %s11, 0
      %p95 = por %p93, %p94
      %p96 = scmp.ne.s32.totalorder %s85, %s88
      %p97 = scmp.eq.s32.totalorder %s16, 3
      %p98 = por %p96, %p97
      %p99 = scmp.ne.s32.totalorder %s88, %s89
      %p100 = scmp.eq.s32.totalorder %s16, 0
      %p101 = por %p99, %p100
      %p102 = scmp.ne.s32.totalorder %s88, %s89
      %p103 = scmp.eq.s32.totalorder %s17, 3
      %p104 = por %p102, %p103
      %p106 = scmp.ne.s32.totalorder %s89, %s105
      %p107 = scmp.eq.s32.totalorder %s17, 0
      %p108 = por %p106, %p107
      %s109 = ssub.s32 %s19, %s26
      %p110 = scmp.eq.s32.totalorder %s109, 0
      %s112 = sadd.s32 %s111, 1
      %s113 = scalar_select %p110, %s111, %s112
      %p116 = pneg %p110
      %p117 = scmp.eq.s32.totalorder %s11, 3
      %p118 = por %p116, %p117
      %p119 = scmp.ne.s32.totalorder %s111, %s114
      %p120 = scmp.eq.s32.totalorder %s11, 0
      %p121 = por %p119, %p120
      %p122 = scmp.ne.s32.totalorder %s111, %s114
      %p123 = scmp.eq.s32.totalorder %s16, 3
      %p124 = por %p122, %p123
      %p125 = scmp.ne.s32.totalorder %s114, %s115
      %p126 = scmp.eq.s32.totalorder %s16, 0
      %p127 = por %p125, %p126
      %p128 = scmp.ne.s32.totalorder %s114, %s115
      %p129 = scmp.eq.s32.totalorder %s17, 3
      %p130 = por %p128, %p129
      %p132 = scmp.ne.s32.totalorder %s115, %s131
      %p133 = scmp.eq.s32.totalorder %s17, 0
      %p134 = por %p132, %p133
      %s136 = sadd.s32 %s135, 1
      %p139 = scmp.eq.s32.totalorder %s11, 3
      %p140 = scmp.ne.s32.totalorder %s135, %s137
      %p141 = scmp.eq.s32.totalorder %s11, 0
      %p142 = por %p140, %p141
      %p143 = scmp.ne.s32.totalorder %s135, %s137
      %p144 = scmp.eq.s32.totalorder %s16, 3
      %p145 = por %p143, %p144
      %p146 = scmp.ne.s32.totalorder %s137, %s138
      %p147 = scmp.eq.s32.totalorder %s16, 0
      %p148 = por %p146, %p147
      %p149 = scmp.ne.s32.totalorder %s137, %s138
      %p150 = scmp.eq.s32.totalorder %s17, 3
      %p151 = por %p149, %p150
      %p153 = scmp.ne.s32.totalorder %s138, %s152
      %p154 = scmp.eq.s32.totalorder %s17, 0
      %p155 = por %p153, %p154
      %s156 = ssub.s32 %s18, %s30
      %p157 = scmp.eq.s32.totalorder %s156, 0
      %s159 = sadd.s32 %s158, 1
      %s160 = scalar_select %p157, %s158, %s159
      %p163 = pneg %p157
      %p164 = scmp.eq.s32.totalorder %s11, 3
      %p165 = por %p163, %p164
      %p166 = scmp.ne.s32.totalorder %s158, %s161
      %p167 = scmp.eq.s32.totalorder %s11, 0
      %p168 = por %p166, %p167
      %p169 = scmp.ne.s32.totalorder %s158, %s161
      %p170 = scmp.eq.s32.totalorder %s16, 3
      %p171 = por %p169, %p170
      %p172 = scmp.ne.s32.totalorder %s161, %s162
      %p173 = scmp.eq.s32.totalorder %s16, 0
      %p174 = por %p172, %p173
      %p175 = scmp.ne.s32.totalorder %s161, %s162
      %p176 = scmp.eq.s32.totalorder %s17, 3
      %p177 = por %p175, %p176
      %p179 = scmp.ne.s32.totalorder %s162, %s178
      %p180 = scmp.eq.s32.totalorder %s17, 0
      %p181 = por %p179, %p180
      %p182 = scmp.le.s32.totalorder 1, %s11
      %p183 = scmp.lt.s32.totalorder %s11, 5
      %p184 = pnand %p182, %p183
      %p185 = pneg %p184
      // Predicated region
      $region9: #{positionwise_feed_forward.1} parent=5 // pred_check
        _
      $region10: #{positionwise_feed_forward.1} parent=5 // pred_check_branch
        %187 = sbr.rel (%p184) target = $region12
      $region11: #{positionwise_feed_forward.1} parent=5 // pred_region
        %s188 = ssub.s32 %s11, 1
        // Predicated region
        $region13: #{positionwise_feed_forward.1} parent=11 // pred_check
          %p189 = pneg %p148
        $region14: #{positionwise_feed_forward.1} parent=11 // pred_check_branch
          %191 = sbr.rel (%p189) target = $region16
        $region15: #{positionwise_feed_forward.1} parent=11 // pred_region
          _
        $region16: #{positionwise_feed_forward.1} parent=11 // pred_fallthru
          _
      $region12: #{positionwise_feed_forward.1} parent=5 // pred_fallthru
        _
      %p192 = scmp.lt.s32.totalorder %s11, 4
      // Predicated region
      $region17: #{positionwise_feed_forward.1} parent=5 // pred_check
        %p193 = pneg %p192
      $region18: #{positionwise_feed_forward.1} parent=5 // pred_check_branch
        %195 = sbr.rel (%p193) target = $region20
      $region19: #{positionwise_feed_forward.1} parent=5 // pred_region
        // Predicated region
        $region21: #{positionwise_feed_forward.1} parent=19 // pred_check
          %p196 = pneg %p43
        $region22: #{positionwise_feed_forward.1} parent=19 // pred_check_branch
          %198 = sbr.rel (%p196) target = $region24
        $region23: #{positionwise_feed_forward.1} parent=19 // pred_region
          %s199 = smul.u32 16, %s18
          %p200 = scmp.lt.s32.totalorder %s199, 31
          %s201 = scalar_select %p200, %s199, 31
          %s202 = smul.addr %s201, 4
          %s203 = scalar_lea.vmem %s0, %s202
          %s204 = smul.u32 16, %s18
        $region24: #{positionwise_feed_forward.1} parent=19 // pred_fallthru
          _
        // Predicated region
        $region25: #{positionwise_feed_forward.1} parent=19 // pred_check
          %p205 = pneg %p69
        $region26: #{positionwise_feed_forward.1} parent=19 // pred_check_branch
          %207 = sbr.rel (%p205) target = $region28
        $region27: #{positionwise_feed_forward.1} parent=19 // pred_region
          %s208 = sand.u32 %s59, 1
          %s209 = sand.u32 %s59, 1
          %s210 = smul.addr %s209, 64
          %s211 = scalar_lea.vmem [#allocation3], %s210
          %s212 = smul.addr %s19, 4
          %s213 = scalar_lea.vmem %s1, %s212
          // Predicated region
          $region29: #{positionwise_feed_forward.1} parent=27 // pred_check
            _
          $region30: #{positionwise_feed_forward.1} parent=27 // pred_check_branch
            %215 = sbr.rel (0) target = $region32
          $region31: #{positionwise_feed_forward.1} parent=27 // pred_region
            // Predicated region
            $region33: #{positionwise_feed_forward.1} parent=31 // pred_check
              _
            $region34: #{positionwise_feed_forward.1} parent=31 // pred_check_branch
              %217 = sbr.rel target = $region36
            $region35: #{positionwise_feed_forward.1} parent=31 // pred_region
              // Predicated region
              $region48: #{positionwise_feed_forward.1} parent=35 // pred_check
                _
              $region49: #{positionwise_feed_forward.1} parent=35 // pred_check_branch
                %263 = sbr.rel (0) target = $region51
              $region50: #{positionwise_feed_forward.1} parent=35 // pred_region
                loop: start=0, step=1, limit=1
                $region52: #{positionwise_feed_forward.1} parent=50 // loop_pre_header
                  _
                $region53: #{positionwise_feed_forward.1} parent=50 // loop_header
                  %s265 = sphi 0, %s269
                  %p266 = scmp.ge.s32.totalorder %s265, 1
                  %s270 = sphi %s213, %s213
                  %s271 = sphi %s211, %s211
                $region54: #{positionwise_feed_forward.1} parent=50 // loop_header_branch
                  %268 = sbr.rel (%p266) target = $region58
                $region55: #{positionwise_feed_forward.1} parent=50 // loop_body
                  _
                $region56: #{positionwise_feed_forward.1} parent=50 // loop_footer
                  %s269 = sadd.s32 1, %s265
                $region57: #{positionwise_feed_forward.1} parent=50 // loop_footer_branch
                  %264 = sbr.rel target = $region53
                $region58: #{positionwise_feed_forward.1} parent=50 // loop_exit
                  _
                %s273 = ssub.s32 16, 1
                loop: start=0, step=1, limit=1
                $region59: #{positionwise_feed_forward.1} parent=50 // loop_pre_header
                  _
                $region60: #{positionwise_feed_forward.1} parent=50 // loop_header
                  %s275 = sphi 0, %s279
                  %p276 = scmp.ge.s32.totalorder %s275, 1
                  %s280 = sphi %s213, %s213
                  %s281 = sphi %s211, %s211
                $region61: #{positionwise_feed_forward.1} parent=50 // loop_header_branch
                  %278 = sbr.rel (%p276) target = $region65
                $region62: #{positionwise_feed_forward.1} parent=50 // loop_body
                  %v282 = vld [vmem:[%s280] sm:%s273]
                  %283 = vst [vmem:[%s281] sm:%s273] %v282
                  %v284 = vld [vmem:[%s280 + $0x8] sm:%s273]
                  %285 = vst [vmem:[%s281 + $0x4] sm:%s273] %v284
                  %v286 = vld [vmem:[%s280 + $0x10] sm:%s273]
                  %287 = vst [vmem:[%s281 + $0x8] sm:%s273] %v286
                  %v288 = vld [vmem:[%s280 + $0x18] sm:%s273]
                  %289 = vst [vmem:[%s281 + $0xc] sm:%s273] %v288
                  %v290 = vld [vmem:[%s280 + $0x20] sm:%s273]
                  %291 = vst [vmem:[%s281 + $0x10] sm:%s273] %v290
                  %v292 = vld [vmem:[%s280 + $0x28] sm:%s273]
                  %293 = vst [vmem:[%s281 + $0x14] sm:%s273] %v292
                  %v294 = vld [vmem:[%s280 + $0x30] sm:%s273]
                  %295 = vst [vmem:[%s281 + $0x18] sm:%s273] %v294
                  %v296 = vld [vmem:[%s280 + $0x38] sm:%s273]
                  %297 = vst [vmem:[%s281 + $0x1c] sm:%s273] %v296
                  %v298 = vld [vmem:[%s280 + $0x40] sm:%s273]
                  %299 = vst [vmem:[%s281 + $0x20] sm:%s273] %v298
                  %v300 = vld [vmem:[%s280 + $0x48] sm:%s273]
                  %301 = vst [vmem:[%s281 + $0x24] sm:%s273] %v300
                  %v302 = vld [vmem:[%s280 + $0x50] sm:%s273]
                  %303 = vst [vmem:[%s281 + $0x28] sm:%s273] %v302
                  %v304 = vld [vmem:[%s280 + $0x58] sm:%s273]
                  %305 = vst [vmem:[%s281 + $0x2c] sm:%s273] %v304
                  %v306 = vld [vmem:[%s280 + $0x60] sm:%s273]
                  %307 = vst [vmem:[%s281 + $0x30] sm:%s273] %v306
                  %v308 = vld [vmem:[%s280 + $0x68] sm:%s273]
                  %309 = vst [vmem:[%s281 + $0x34] sm:%s273] %v308
                  %v310 = vld [vmem:[%s280 + $0x70] sm:%s273]
                  %311 = vst [vmem:[%s281 + $0x38] sm:%s273] %v310
                  %v312 = vld [vmem:[%s280 + $0x78] sm:%s273]
                  %313 = vst [vmem:[%s281 + $0x3c] sm:%s273] %v312
                $region63: #{positionwise_feed_forward.1} parent=50 // loop_footer
                  %s279 = sadd.s32 1, %s275
                $region64: #{positionwise_feed_forward.1} parent=50 // loop_footer_branch
                  %274 = sbr.rel target = $region60
                $region65: #{positionwise_feed_forward.1} parent=50 // loop_exit
                  _
              $region51: #{positionwise_feed_forward.1} parent=35 // pred_fallthru
                _
            $region36: #{positionwise_feed_forward.1} parent=31 // pred_fallthru
              _
            // Predicated region
            $region37: #{positionwise_feed_forward.1} parent=31 // pred_check
              _
            $region38: #{positionwise_feed_forward.1} parent=31 // pred_check_branch
              %219 = sbr.rel (0) target = $region40
            $region39: #{positionwise_feed_forward.1} parent=31 // pred_region
              %s221 = ssub.s32 16, 1
              loop: start=0, step=1, limit=1
              $region41: #{positionwise_feed_forward.1} parent=39 // loop_pre_header
                _
              $region42: #{positionwise_feed_forward.1} parent=39 // loop_header
                %s223 = sphi 0, %s227
                %p224 = scmp.ge.s32.totalorder %s223, 1
                %s228 = sphi %s213, %s213
                %s229 = sphi %s211, %s211
              $region43: #{positionwise_feed_forward.1} parent=39 // loop_header_branch
                %226 = sbr.rel (%p224) target = $region47
              $region44: #{positionwise_feed_forward.1} parent=39 // loop_body
                %v230 = vld [vmem:[%s228] sm:%s221]
                %231 = vst [vmem:[%s229] sm:%s221] %v230
                %v232 = vld [vmem:[%s228 + $0x8] sm:%s221]
                %233 = vst [vmem:[%s229 + $0x4] sm:%s221] %v232
                %v234 = vld [vmem:[%s228 + $0x10] sm:%s221]
                %235 = vst [vmem:[%s229 + $0x8] sm:%s221] %v234
                %v236 = vld [vmem:[%s228 + $0x18] sm:%s221]
                %237 = vst [vmem:[%s229 + $0xc] sm:%s221] %v236
                %v238 = vld [vmem:[%s228 + $0x20] sm:%s221]
                %239 = vst [vmem:[%s229 + $0x10] sm:%s221] %v238
                %v240 = vld [vmem:[%s228 + $0x28] sm:%s221]
                %241 = vst [vmem:[%s229 + $0x14] sm:%s221] %v240
                %v242 = vld [vmem:[%s228 + $0x30] sm:%s221]
                %243 = vst [vmem:[%s229 + $0x18] sm:%s221] %v242
                %v244 = vld [vmem:[%s228 + $0x38] sm:%s221]
                %245 = vst [vmem:[%s229 + $0x1c] sm:%s221] %v244
                %v246 = vld [vmem:[%s228 + $0x40] sm:%s221]
                %247 = vst [vmem:[%s229 + $0x20] sm:%s221] %v246
                %v248 = vld [vmem:[%s228 + $0x48] sm:%s221]
                %249 = vst [vmem:[%s229 + $0x24] sm:%s221] %v248
                %v250 = vld [vmem:[%s228 + $0x50] sm:%s221]
                %251 = vst [vmem:[%s229 + $0x28] sm:%s221] %v250
                %v252 = vld [vmem:[%s228 + $0x58] sm:%s221]
                %253 = vst [vmem:[%s229 + $0x2c] sm:%s221] %v252
                %v254 = vld [vmem:[%s228 + $0x60] sm:%s221]
                %255 = vst [vmem:[%s229 + $0x30] sm:%s221] %v254
                %v256 = vld [vmem:[%s228 + $0x68] sm:%s221]
                %257 = vst [vmem:[%s229 + $0x34] sm:%s221] %v256
                %v258 = vld [vmem:[%s228 + $0x70] sm:%s221]
                %259 = vst [vmem:[%s229 + $0x38] sm:%s221] %v258
                %v260 = vld [vmem:[%s228 + $0x78] sm:%s221]
                %261 = vst [vmem:[%s229 + $0x3c] sm:%s221] %v260
              $region45: #{positionwise_feed_forward.1} parent=39 // loop_footer
                %s227 = sadd.s32 1, %s223
              $region46: #{positionwise_feed_forward.1} parent=39 // loop_footer_branch
                %222 = sbr.rel target = $region42
              $region47: #{positionwise_feed_forward.1} parent=39 // loop_exit
                _
            $region40: #{positionwise_feed_forward.1} parent=31 // pred_fallthru
              _
          $region32: #{positionwise_feed_forward.1} parent=27 // pred_fallthru
            _
          %314 = vnop
        $region28: #{positionwise_feed_forward.1} parent=19 // pred_fallthru
          _
        // Predicated region
        $region66: #{positionwise_feed_forward.1} parent=19 // pred_check
          %p315 = pneg %p95
        $region67: #{positionwise_feed_forward.1} parent=19 // pred_check_branch
          %317 = sbr.rel (%p315) target = $region69
        $region68: #{positionwise_feed_forward.1} parent=19 // pred_region
          %p318 = scmp.lt.s32.totalorder %s19, 1
          %s319 = scalar_select %p318, %s19, 1
          %s320 = scalar_lea.vmem %s2, %s319
        $region69: #{positionwise_feed_forward.1} parent=19 // pred_fallthru
          _
        // Predicated region
        $region70: #{positionwise_feed_forward.1} parent=19 // pred_check
          %p321 = pneg %p121
        $region71: #{positionwise_feed_forward.1} parent=19 // pred_check_branch
          %323 = sbr.rel (%p321) target = $region73
        $region72: #{positionwise_feed_forward.1} parent=19 // pred_region
          %s324 = smul.u32 16, %s19
          %p325 = scmp.lt.s32.totalorder %s324, 31
          %s326 = scalar_select %p325, %s324, 31
          %s327 = smul.addr %s326, 4
          %s328 = scalar_lea.vmem %s3, %s327
          %s329 = smul.u32 16, %s19
        $region73: #{positionwise_feed_forward.1} parent=19 // pred_fallthru
          _
      $region20: #{positionwise_feed_forward.1} parent=5 // pred_fallthru
        _
      %p330 = scmp.le.s32.totalorder 1, %s11
      %p331 = scmp.lt.s32.totalorder %s11, 5
      %p332 = pnand %p330, %p331
      %p333 = pneg %p332
      // Predicated region
      $region74: #{positionwise_feed_forward.1} parent=5 // pred_check
        _
      $region75: #{positionwise_feed_forward.1} parent=5 // pred_check_branch
        %335 = sbr.rel (%p332) target = $region77
      $region76: #{positionwise_feed_forward.1} parent=5 // pred_region
        %s336 = ssub.s32 %s11, 1
        %s337 = sand.u32 %s62, 1
        %s338 = sand.u32 %s62, 1
        %s339 = smul.addr %s338, 64
        %s340 = scalar_lea.vmem [#allocation3], %s339
        // Predicated region
        $region78: #{positionwise_feed_forward.1} parent=76 // pred_check
          %p341 = pneg %p75
        $region79: #{positionwise_feed_forward.1} parent=76 // pred_check_branch
          %343 = sbr.rel (%p341) target = $region81
        $region80: #{positionwise_feed_forward.1} parent=76 // pred_region
          _
        $region81: #{positionwise_feed_forward.1} parent=76 // pred_fallthru
          _
        %s344 = smul.u32 16, %s20
        %p345 = scmp.lt.s32.totalorder %s344, 31
        %s346 = scalar_select %p345, %s344, 31
        %s347 = smul.addr %s346, 4
        %s348 = scalar_lea.vmem %s0, %s347
        %p349 = pneg %p49
        %p350 = pneg %p46
        %s351 = sand.u32 %s62, 1
        %s352 = sand.u32 %s62, 1
        %s353 = smul.addr %s352, 64
        %s354 = scalar_lea.vmem [#allocation3], %s353
        %p355 = pneg %p75
        %p356 = pneg %p72
        %p357 = scmp.lt.s32.totalorder %s21, 1
        %s358 = scalar_select %p357, %s21, 1
        %s359 = scalar_lea.vmem %s2, %s358
        %p360 = pneg %p101
        %p361 = pneg %p98
        %s362 = smul.u32 16, %s21
        %p363 = scmp.lt.s32.totalorder %s362, 31
        %s364 = scalar_select %p363, %s362, 31
        %s365 = smul.addr %s364, 4
        %s366 = scalar_lea.vmem %s3, %s365
        %p367 = pneg %p127
        %p368 = pneg %p124
        %p369 = pneg %p148
        %p370 = pneg %p145
        %p371 = pneg %p174
        %p372 = pneg %p171
        %s373 = smul.u32 16, %s20
        %p374 = scmp.lt.s32.totalorder %s373, 31
        %s375 = scalar_select %p374, %s373, 31
        %s376 = smul.addr %s375, 8
        %s377 = scalar_lea.vmem %s5, %s376
        %s378 = smul.u32 16, %s20
        %p379 = scmp.lt.s32.totalorder %s378, 31
        %s380 = scalar_select %p379, %s378, 31
        %s381 = smul.addr %s380, 4
        %s382 = scalar_lea.vmem %s0, %s381
        %s383 = smul.u32 16, %s20
        %p384 = scmp.lt.s32.totalorder %s21, 1
        %s385 = scalar_select %p384, %s21, 1
        %s386 = scalar_lea.vmem %s2, %s385
        %s387 = smul.u32 16, %s21
        %p388 = scmp.lt.s32.totalorder %s387, 31
        %s389 = scalar_select %p388, %s387, 31
        %s390 = smul.addr %s389, 4
        %s391 = scalar_lea.vmem %s3, %s390
        %s392 = smul.u32 16, %s21
        %s393 = smul.u32 16, %s20
        %p394 = scmp.lt.s32.totalorder %s393, 31
        %s395 = scalar_select %p394, %s393, 31
        %s396 = smul.addr %s395, 8
        %s397 = scalar_lea.vmem %s5, %s396
        %s398 = smul.u32 16, %s20
        %p400 = scmp.eq.s32.totalorder %s21, 0
        // Predicated region
        $region82: #{positionwise_feed_forward.1} parent=76 // pred_check
          %p401 = pneg %p400
        $region83: #{positionwise_feed_forward.1} parent=76 // pred_check_branch
          %403 = sbr.rel (%p401) target = $region85
        $region84: #{positionwise_feed_forward.1} parent=76 // pred_region
          %404 = vst [vmem:[#allocation2] sm:$0xff] 0.0
          %405 = vst [vmem:[#allocation2 + $0x8] sm:$0xff] 0.0
          %406 = vst [vmem:[#allocation2 + $0x10] sm:$0xff] 0.0
          %407 = vst [vmem:[#allocation2 + $0x18] sm:$0xff] 0.0
          %408 = vst [vmem:[#allocation2 + $0x20] sm:$0xff] 0.0
          %409 = vst [vmem:[#allocation2 + $0x28] sm:$0xff] 0.0
          %410 = vst [vmem:[#allocation2 + $0x30] sm:$0xff] 0.0
          %411 = vst [vmem:[#allocation2 + $0x38] sm:$0xff] 0.0
          %412 = vst [vmem:[#allocation2 + $0x40] sm:$0xff] 0.0
          %413 = vst [vmem:[#allocation2 + $0x48] sm:$0xff] 0.0
          %414 = vst [vmem:[#allocation2 + $0x50] sm:$0xff] 0.0
          %415 = vst [vmem:[#allocation2 + $0x58] sm:$0xff] 0.0
          %416 = vst [vmem:[#allocation2 + $0x60] sm:$0xff] 0.0
          %417 = vst [vmem:[#allocation2 + $0x68] sm:$0xff] 0.0
          %418 = vst [vmem:[#allocation2 + $0x70] sm:$0xff] 0.0
          %419 = vst [vmem:[#allocation2 + $0x78] sm:$0xff] 0.0
        $region85: #{positionwise_feed_forward.1} parent=76 // pred_fallthru
          _
        %v420 = vld [vmem:[%s382] sm:$0xf]
        %v421 = vld [vmem:[%s382 + $0x4] sm:$0xf]
        %v422 = vld [vmem:[%s382 + $0x8] sm:$0xf]
        %v423 = vld [vmem:[%s382 + $0xc] sm:$0xf]
        %v424 = vld [vmem:[%s382 + $0x10] sm:$0xf]
        %v425 = vld [vmem:[%s382 + $0x14] sm:$0xf]
        %v426 = vld [vmem:[%s382 + $0x18] sm:$0xf]
        %v427 = vld [vmem:[%s382 + $0x1c] sm:$0xf]
        %v428 = vld [vmem:[%s382 + $0x20] sm:$0xf]
        %v429 = vld [vmem:[%s382 + $0x24] sm:$0xf]
        %v430 = vld [vmem:[%s382 + $0x28] sm:$0xf]
        %v431 = vld [vmem:[%s382 + $0x2c] sm:$0xf]
        %v432 = vld [vmem:[%s382 + $0x30] sm:$0xf]
        %v433 = vld [vmem:[%s382 + $0x34] sm:$0xf]
        %v434 = vld [vmem:[%s382 + $0x38] sm:$0xf]
        %v435 = vld [vmem:[%s382 + $0x3c] sm:$0xf]
        %v436 = vld [vmem:[%s340] sm:$0xf]
        %v437 = vld [vmem:[%s340 + $0x4] sm:$0xf]
        %v438 = vld [vmem:[%s340 + $0x8] sm:$0xf]
        %v439 = vld [vmem:[%s340 + $0xc] sm:$0xf]
        %v440 = vld [vmem:[%s340 + $0x10] sm:$0xf]
        %v441 = vld [vmem:[%s340 + $0x14] sm:$0xf]
        %v442 = vld [vmem:[%s340 + $0x18] sm:$0xf]
        %v443 = vld [vmem:[%s340 + $0x1c] sm:$0xf]
        %v444 = vld [vmem:[%s340 + $0x20] sm:$0xf]
        %v445 = vld [vmem:[%s340 + $0x24] sm:$0xf]
        %v446 = vld [vmem:[%s340 + $0x28] sm:$0xf]
        %v447 = vld [vmem:[%s340 + $0x2c] sm:$0xf]
        %v448 = vld [vmem:[%s340 + $0x30] sm:$0xf]
        %v449 = vld [vmem:[%s340 + $0x34] sm:$0xf]
        %v450 = vld [vmem:[%s340 + $0x38] sm:$0xf]
        %v451 = vld [vmem:[%s340 + $0x3c] sm:$0xf]
        %v452 = vld [vmem:[%s386] sm:$0x1]
        %v454 = vlaneseq
        %v455 = vshrl.u32 %v454, 7
        %v456 = vsub.s32 0, %v455
        %v457 = vrot.slane %v452, %v456
        %v475 = vunpack.c.l.b16 %v420
        %v476 = vunpack.c.l.b16 %v421
        %v477 = vunpack.c.l.b16 %v422
        %v478 = vunpack.c.l.b16 %v423
        %v479 = vunpack.c.l.b16 %v424
        %v480 = vunpack.c.l.b16 %v425
        %v481 = vunpack.c.l.b16 %v426
        %v482 = vunpack.c.l.b16 %v427
        %v483 = vunpack.c.l.b16 %v428
        %v484 = vunpack.c.l.b16 %v429
        %v485 = vunpack.c.l.b16 %v430
        %v486 = vunpack.c.l.b16 %v431
        %v487 = vunpack.c.l.b16 %v432
        %v488 = vunpack.c.l.b16 %v433
        %v489 = vunpack.c.l.b16 %v434
        %v490 = vunpack.c.l.b16 %v435
        %v491 = vpack.c.b16 %v476, %v475
        %v492 = vpack.c.b16 %v478, %v477
        %v493 = vpack.c.b16 %v480, %v479
        %v494 = vpack.c.b16 %v482, %v481
        %v495 = vpack.c.b16 %v484, %v483
        %v496 = vpack.c.b16 %v486, %v485
        %v497 = vpack.c.b16 %v488, %v487
        %v498 = vpack.c.b16 %v490, %v489
        %v523 = vunpack.c.l.b16 %v436
        %v524 = vunpack.c.l.b16 %v437
        %v525 = vunpack.c.l.b16 %v438
        %v526 = vunpack.c.l.b16 %v439
        %v527 = vunpack.c.l.b16 %v440
        %v528 = vunpack.c.l.b16 %v441
        %v529 = vunpack.c.l.b16 %v442
        %v530 = vunpack.c.l.b16 %v443
        %v531 = vunpack.c.l.b16 %v444
        %v532 = vunpack.c.l.b16 %v445
        %v533 = vunpack.c.l.b16 %v446
        %v534 = vunpack.c.l.b16 %v447
        %v535 = vunpack.c.l.b16 %v448
        %v536 = vunpack.c.l.b16 %v449
        %v537 = vunpack.c.l.b16 %v450
        %v538 = vunpack.c.l.b16 %v451
        %v539 = vpack.c.b16 %v524, %v523
        %v540 = vpack.c.b16 %v526, %v525
        %v541 = vpack.c.b16 %v528, %v527
        %v542 = vpack.c.b16 %v530, %v529
        %v543 = vpack.c.b16 %v532, %v531
        %v544 = vpack.c.b16 %v534, %v533
        %v545 = vpack.c.b16 %v536, %v535
        %v546 = vpack.c.b16 %v538, %v537
        %555 = vmatprep.subr.bf16.mxu0 0
        %556 = vmatpush1.bf16.msra.mxu0 %v546
        %557 = vmatprep.subr.bf16.mxu0 0
        %558 = vmatpush1.bf16.msra.mxu0 %v545
        %559 = vmatprep.subr.bf16.mxu0 0
        %560 = vmatpush1.bf16.msra.mxu0 %v544
        %561 = vmatprep.subr.bf16.mxu0 0
        %562 = vmatpush1.bf16.msra.mxu0 %v543
        %563 = vmatprep.subr.bf16.mxu0 0
        %564 = vmatpush1.bf16.msra.mxu0 %v542
        %565 = vmatprep.subr.bf16.mxu0 0
        %566 = vmatpush1.bf16.msra.mxu0 %v541
        %567 = vmatprep.subr.bf16.mxu0 0
        %568 = vmatpush1.bf16.msra.mxu0 %v540
        %569 = vmatprep.subr.bf16.mxu0 0
        %570 = vmatpush1.bf16.msra.mxu0 %v539
        %571 = vmatprep.subr.bf16.mxu0 0
        %572 = vmatpush2.bf16.msra.mxu0 0
        %573 = vmatprep.subr.bf16.mxu0 0
        %574 = vmatpush2.bf16.msra.mxu0 0
        %575 = vmatprep.subr.bf16.mxu0 0
        %576 = vmatpush2.bf16.msra.mxu0 0
        %577 = vmatprep.subr.bf16.mxu0 0
        %578 = vmatpush2.bf16.msra.mxu0 0
        %579 = vmatprep.subr.bf16.mxu0 0
        %580 = vmatpush2.bf16.msra.mxu0 0
        %581 = vmatprep.subr.bf16.mxu0 0
        %582 = vmatpush2.bf16.msra.mxu0 0
        %583 = vmatprep.subr.bf16.mxu0 0
        %584 = vmatpush2.bf16.msra.mxu0 0
        %585 = vmatprep.subr.bf16.mxu0 0
        %586 = vmatpush2.bf16.msra.mxu0 0
        %587 = vmatprep.mubr.bf16.mxu0 0
        %588 = vmatmul.mubr.bf16.gmra.mxu0 %v491
        %v589 = vpop.f32.mrf.mxu0
        %v590 = vadd.f32 %v457, %v589
        %v591 = vpop.f32.mrf.mxu0
        %v592 = vpop.f32.mrf.mxu0
        %v593 = vadd.f32 %v457, %v592
        %v594 = vpop.f32.mrf.mxu0
        %595 = vmatprep.mubr.bf16.mxu0 0
        %596 = vmatmul.mubr.bf16.gmra.mxu0 %v492
        %v597 = vpop.f32.mrf.mxu0
        %v598 = vadd.f32 %v457, %v597
        %v599 = vpop.f32.mrf.mxu0
        %v600 = vpop.f32.mrf.mxu0
        %v601 = vadd.f32 %v457, %v600
        %v602 = vpop.f32.mrf.mxu0
        %603 = vmatprep.mubr.bf16.mxu0 0
        %604 = vmatmul.mubr.bf16.gmra.mxu0 %v493
        %v605 = vpop.f32.mrf.mxu0
        %v606 = vadd.f32 %v457, %v605
        %v607 = vpop.f32.mrf.mxu0
        %v608 = vpop.f32.mrf.mxu0
        %v609 = vadd.f32 %v457, %v608
        %v610 = vpop.f32.mrf.mxu0
        %611 = vmatprep.mubr.bf16.mxu0 0
        %612 = vmatmul.mubr.bf16.gmra.mxu0 %v494
        %v613 = vpop.f32.mrf.mxu0
        %v614 = vadd.f32 %v457, %v613
        %v615 = vpop.f32.mrf.mxu0
        %v616 = vpop.f32.mrf.mxu0
        %v617 = vadd.f32 %v457, %v616
        %v618 = vpop.f32.mrf.mxu0
        %619 = vmatprep.mubr.bf16.mxu0 0
        %620 = vmatmul.mubr.bf16.gmra.mxu0 %v495
        %v621 = vpop.f32.mrf.mxu0
        %v622 = vadd.f32 %v457, %v621
        %v623 = vpop.f32.mrf.mxu0
        %v624 = vpop.f32.mrf.mxu0
        %v625 = vadd.f32 %v457, %v624
        %v626 = vpop.f32.mrf.mxu0
        %627 = vmatprep.mubr.bf16.mxu0 0
        %628 = vmatmul.mubr.bf16.gmra.mxu0 %v496
        %v629 = vpop.f32.mrf.mxu0
        %v630 = vadd.f32 %v457, %v629
        %v631 = vpop.f32.mrf.mxu0
        %v632 = vpop.f32.mrf.mxu0
        %v633 = vadd.f32 %v457, %v632
        %v634 = vpop.f32.mrf.mxu0
        %635 = vmatprep.mubr.bf16.mxu0 0
        %636 = vmatmul.mubr.bf16.gmra.mxu0 %v497
        %v637 = vpop.f32.mrf.mxu0
        %v638 = vadd.f32 %v457, %v637
        %v639 = vpop.f32.mrf.mxu0
        %v640 = vpop.f32.mrf.mxu0
        %v641 = vadd.f32 %v457, %v640
        %v642 = vpop.f32.mrf.mxu0
        %643 = vmatprep.mubr.bf16.mxu0 0
        %644 = vmatmul.mubr.bf16.gmra.mxu0 %v498
        %v645 = vpop.f32.mrf.mxu0
        %v646 = vadd.f32 %v457, %v645
        %v647 = vpop.f32.mrf.mxu0
        %v648 = vpop.f32.mrf.mxu0
        %v649 = vadd.f32 %v457, %v648
        %v650 = vpop.f32.mrf.mxu0
        %651 = vdwg.mxu0
        %v652 = vmax.f32 %v590, 0.0
        %v653 = vmax.f32 %v593, 0.0
        %v654 = vmax.f32 %v598, 0.0
        %v655 = vmax.f32 %v601, 0.0
        %v656 = vmax.f32 %v606, 0.0
        %v657 = vmax.f32 %v609, 0.0
        %v658 = vmax.f32 %v614, 0.0
        %v659 = vmax.f32 %v617, 0.0
        %v660 = vmax.f32 %v622, 0.0
        %v661 = vmax.f32 %v625, 0.0
        %v662 = vmax.f32 %v630, 0.0
        %v663 = vmax.f32 %v633, 0.0
        %v664 = vmax.f32 %v638, 0.0
        %v665 = vmax.f32 %v641, 0.0
        %v666 = vmax.f32 %v646, 0.0
        %v667 = vmax.f32 %v649, 0.0
        %v668 = vld [vmem:[#allocation2] sm:$0xff]
        %v669 = vld [vmem:[#allocation2 + $0x8] sm:$0xff]
        %v670 = vld [vmem:[#allocation2 + $0x10] sm:$0xff]
        %v671 = vld [vmem:[#allocation2 + $0x18] sm:$0xff]
        %v672 = vld [vmem:[#allocation2 + $0x20] sm:$0xff]
        %v673 = vld [vmem:[#allocation2 + $0x28] sm:$0xff]
        %v674 = vld [vmem:[#allocation2 + $0x30] sm:$0xff]
        %v675 = vld [vmem:[#allocation2 + $0x38] sm:$0xff]
        %v676 = vld [vmem:[#allocation2 + $0x40] sm:$0xff]
        %v677 = vld [vmem:[#allocation2 + $0x48] sm:$0xff]
        %v678 = vld [vmem:[#allocation2 + $0x50] sm:$0xff]
        %v679 = vld [vmem:[#allocation2 + $0x58] sm:$0xff]
        %v680 = vld [vmem:[#allocation2 + $0x60] sm:$0xff]
        %v681 = vld [vmem:[#allocation2 + $0x68] sm:$0xff]
        %v682 = vld [vmem:[#allocation2 + $0x70] sm:$0xff]
        %v683 = vld [vmem:[#allocation2 + $0x78] sm:$0xff]
        %v684 = vpack.c.bf16 %v653, %v652
        %v685 = vpack.c.bf16 %v655, %v654
        %v686 = vpack.c.bf16 %v657, %v656
        %v687 = vpack.c.bf16 %v659, %v658
        %v688 = vpack.c.bf16 %v661, %v660
        %v689 = vpack.c.bf16 %v663, %v662
        %v690 = vpack.c.bf16 %v665, %v664
        %v691 = vpack.c.bf16 %v667, %v666
        %v692 = vld [vmem:[%s391] sm:$0xf]
        %v693 = vld [vmem:[%s391 + $0x4] sm:$0xf]
        %v694 = vld [vmem:[%s391 + $0x8] sm:$0xf]
        %v695 = vld [vmem:[%s391 + $0xc] sm:$0xf]
        %v696 = vld [vmem:[%s391 + $0x10] sm:$0xf]
        %v697 = vld [vmem:[%s391 + $0x14] sm:$0xf]
        %v698 = vld [vmem:[%s391 + $0x18] sm:$0xf]
        %v699 = vld [vmem:[%s391 + $0x1c] sm:$0xf]
        %v700 = vld [vmem:[%s391 + $0x20] sm:$0xf]
        %v701 = vld [vmem:[%s391 + $0x24] sm:$0xf]
        %v702 = vld [vmem:[%s391 + $0x28] sm:$0xf]
        %v703 = vld [vmem:[%s391 + $0x2c] sm:$0xf]
        %v704 = vld [vmem:[%s391 + $0x30] sm:$0xf]
        %v705 = vld [vmem:[%s391 + $0x34] sm:$0xf]
        %v706 = vld [vmem:[%s391 + $0x38] sm:$0xf]
        %v707 = vld [vmem:[%s391 + $0x3c] sm:$0xf]
        %v724 = vunpack.c.l.b16 %v692
        %v725 = vunpack.c.l.b16 %v693
        %v726 = vunpack.c.l.b16 %v694
        %v727 = vunpack.c.l.b16 %v695
        %v728 = vunpack.c.l.b16 %v696
        %v729 = vunpack.c.l.b16 %v697
        %v730 = vunpack.c.l.b16 %v698
        %v731 = vunpack.c.l.b16 %v699
        %v732 = vunpack.c.l.b16 %v700
        %v733 = vunpack.c.l.b16 %v701
        %v734 = vunpack.c.l.b16 %v702
        %v735 = vunpack.c.l.b16 %v703
        %v736 = vunpack.c.l.b16 %v704
        %v737 = vunpack.c.l.b16 %v705
        %v738 = vunpack.c.l.b16 %v706
        %v739 = vunpack.c.l.b16 %v707
        %v740 = vpack.c.b16 %v725, %v724
        %v741 = vpack.c.b16 %v727, %v726
        %v742 = vpack.c.b16 %v729, %v728
        %v743 = vpack.c.b16 %v731, %v730
        %v744 = vpack.c.b16 %v733, %v732
        %v745 = vpack.c.b16 %v735, %v734
        %v746 = vpack.c.b16 %v737, %v736
        %v747 = vpack.c.b16 %v739, %v738
        %756 = vmatprep.subr.bf16.mxu0 0
        %757 = vmatpush1.bf16.msra.mxu0 %v747
        %758 = vmatprep.subr.bf16.mxu0 0
        %759 = vmatpush1.bf16.msra.mxu0 %v746
        %760 = vmatprep.subr.bf16.mxu0 0
        %761 = vmatpush1.bf16.msra.mxu0 %v745
        %762 = vmatprep.subr.bf16.mxu0 0
        %763 = vmatpush1.bf16.msra.mxu0 %v744
        %764 = vmatprep.subr.bf16.mxu0 0
        %765 = vmatpush1.bf16.msra.mxu0 %v743
        %766 = vmatprep.subr.bf16.mxu0 0
        %767 = vmatpush1.bf16.msra.mxu0 %v742
        %768 = vmatprep.subr.bf16.mxu0 0
        %769 = vmatpush1.bf16.msra.mxu0 %v741
        %770 = vmatprep.subr.bf16.mxu0 0
        %771 = vmatpush1.bf16.msra.mxu0 %v740
        %772 = vmatprep.subr.bf16.mxu0 0
        %773 = vmatpush2.bf16.msra.mxu0 0
        %774 = vmatprep.subr.bf16.mxu0 0
        %775 = vmatpush2.bf16.msra.mxu0 0
        %776 = vmatprep.subr.bf16.mxu0 0
        %777 = vmatpush2.bf16.msra.mxu0 0
        %778 = vmatprep.subr.bf16.mxu0 0
        %779 = vmatpush2.bf16.msra.mxu0 0
        %780 = vmatprep.subr.bf16.mxu0 0
        %781 = vmatpush2.bf16.msra.mxu0 0
        %782 = vmatprep.subr.bf16.mxu0 0
        %783 = vmatpush2.bf16.msra.mxu0 0
        %784 = vmatprep.subr.bf16.mxu0 0
        %785 = vmatpush2.bf16.msra.mxu0 0
        %786 = vmatprep.subr.bf16.mxu0 0
        %787 = vmatpush2.bf16.msra.mxu0 0
        %788 = vmatprep.mubr.bf16.mxu0 0
        %789 = vmatmul.mubr.bf16.gmra.mxu0 %v684
        %v790 = vpop.f32.mrf.mxu0
        %v791 = vadd.f32 0.0, %v790
        %v792 = vpop.f32.mrf.mxu0
        %v793 = vpop.f32.mrf.mxu0
        %v794 = vadd.f32 0.0, %v793
        %v795 = vpop.f32.mrf.mxu0
        %796 = vmatprep.mubr.bf16.mxu0 0
        %797 = vmatmul.mubr.bf16.gmra.mxu0 %v685
        %v798 = vpop.f32.mrf.mxu0
        %v799 = vadd.f32 0.0, %v798
        %v800 = vpop.f32.mrf.mxu0
        %v801 = vpop.f32.mrf.mxu0
        %v802 = vadd.f32 0.0, %v801
        %v803 = vpop.f32.mrf.mxu0
        %804 = vmatprep.mubr.bf16.mxu0 0
        %805 = vmatmul.mubr.bf16.gmra.mxu0 %v686
        %v806 = vpop.f32.mrf.mxu0
        %v807 = vadd.f32 0.0, %v806
        %v808 = vpop.f32.mrf.mxu0
        %v809 = vpop.f32.mrf.mxu0
        %v810 = vadd.f32 0.0, %v809
        %v811 = vpop.f32.mrf.mxu0
        %812 = vmatprep.mubr.bf16.mxu0 0
        %813 = vmatmul.mubr.bf16.gmra.mxu0 %v687
        %v814 = vpop.f32.mrf.mxu0
        %v815 = vadd.f32 0.0, %v814
        %v816 = vpop.f32.mrf.mxu0
        %v817 = vpop.f32.mrf.mxu0
        %v818 = vadd.f32 0.0, %v817
        %v819 = vpop.f32.mrf.mxu0
        %820 = vmatprep.mubr.bf16.mxu0 0
        %821 = vmatmul.mubr.bf16.gmra.mxu0 %v688
        %v822 = vpop.f32.mrf.mxu0
        %v823 = vadd.f32 0.0, %v822
        %v824 = vpop.f32.mrf.mxu0
        %v825 = vpop.f32.mrf.mxu0
        %v826 = vadd.f32 0.0, %v825
        %v827 = vpop.f32.mrf.mxu0
        %828 = vmatprep.mubr.bf16.mxu0 0
        %829 = vmatmul.mubr.bf16.gmra.mxu0 %v689
        %v830 = vpop.f32.mrf.mxu0
        %v831 = vadd.f32 0.0, %v830
        %v832 = vpop.f32.mrf.mxu0
        %v833 = vpop.f32.mrf.mxu0
        %v834 = vadd.f32 0.0, %v833
        %v835 = vpop.f32.mrf.mxu0
        %836 = vmatprep.mubr.bf16.mxu0 0
        %837 = vmatmul.mubr.bf16.gmra.mxu0 %v690
        %v838 = vpop.f32.mrf.mxu0
        %v839 = vadd.f32 0.0, %v838
        %v840 = vpop.f32.mrf.mxu0
        %v841 = vpop.f32.mrf.mxu0
        %v842 = vadd.f32 0.0, %v841
        %v843 = vpop.f32.mrf.mxu0
        %844 = vmatprep.mubr.bf16.mxu0 0
        %845 = vmatmul.mubr.bf16.gmra.mxu0 %v691
        %v846 = vpop.f32.mrf.mxu0
        %v847 = vadd.f32 0.0, %v846
        %v848 = vpop.f32.mrf.mxu0
        %v849 = vpop.f32.mrf.mxu0
        %v850 = vadd.f32 0.0, %v849
        %v851 = vpop.f32.mrf.mxu0
        %852 = vdwg.mxu0
        %v853 = vadd.f32 %v668, %v791
        %v854 = vadd.f32 %v669, %v794
        %v855 = vadd.f32 %v670, %v799
        %v856 = vadd.f32 %v671, %v802
        %v857 = vadd.f32 %v672, %v807
        %v858 = vadd.f32 %v673, %v810
        %v859 = vadd.f32 %v674, %v815
        %v860 = vadd.f32 %v675, %v818
        %v861 = vadd.f32 %v676, %v823
        %v862 = vadd.f32 %v677, %v826
        %v863 = vadd.f32 %v678, %v831
        %v864 = vadd.f32 %v679, %v834
        %v865 = vadd.f32 %v680, %v839
        %v866 = vadd.f32 %v681, %v842
        %v867 = vadd.f32 %v682, %v847
        %v868 = vadd.f32 %v683, %v850
        %869 = vst [vmem:[#allocation2] sm:$0xff] %v853
        %870 = vst [vmem:[#allocation2 + $0x8] sm:$0xff] %v854
        %871 = vst [vmem:[#allocation2 + $0x10] sm:$0xff] %v855
        %872 = vst [vmem:[#allocation2 + $0x18] sm:$0xff] %v856
        %873 = vst [vmem:[#allocation2 + $0x20] sm:$0xff] %v857
        %874 = vst [vmem:[#allocation2 + $0x28] sm:$0xff] %v858
        %875 = vst [vmem:[#allocation2 + $0x30] sm:$0xff] %v859
        %876 = vst [vmem:[#allocation2 + $0x38] sm:$0xff] %v860
        %877 = vst [vmem:[#allocation2 + $0x40] sm:$0xff] %v861
        %878 = vst [vmem:[#allocation2 + $0x48] sm:$0xff] %v862
        %879 = vst [vmem:[#allocation2 + $0x50] sm:$0xff] %v863
        %880 = vst [vmem:[#allocation2 + $0x58] sm:$0xff] %v864
        %881 = vst [vmem:[#allocation2 + $0x60] sm:$0xff] %v865
        %882 = vst [vmem:[#allocation2 + $0x68] sm:$0xff] %v866
        %883 = vst [vmem:[#allocation2 + $0x70] sm:$0xff] %v867
        %884 = vst [vmem:[#allocation2 + $0x78] sm:$0xff] %v868
        %p885 = scmp.eq.s32.totalorder %s21, 1
        // Predicated region
        $region86: #{positionwise_feed_forward.1} parent=76 // pred_check
          %p886 = pneg %p885
        $region87: #{positionwise_feed_forward.1} parent=76 // pred_check_branch
          %888 = sbr.rel (%p886) target = $region89
        $region88: #{positionwise_feed_forward.1} parent=76 // pred_region
          %v889 = vld [vmem:[#allocation2] sm:$0xff]
          %v890 = vld [vmem:[#allocation2 + $0x8] sm:$0xff]
          %v891 = vld [vmem:[#allocation2 + $0x10] sm:$0xff]
          %v892 = vld [vmem:[#allocation2 + $0x18] sm:$0xff]
          %v893 = vld [vmem:[#allocation2 + $0x20] sm:$0xff]
          %v894 = vld [vmem:[#allocation2 + $0x28] sm:$0xff]
          %v895 = vld [vmem:[#allocation2 + $0x30] sm:$0xff]
          %v896 = vld [vmem:[#allocation2 + $0x38] sm:$0xff]
          %v897 = vld [vmem:[#allocation2 + $0x40] sm:$0xff]
          %v898 = vld [vmem:[#allocation2 + $0x48] sm:$0xff]
          %v899 = vld [vmem:[#allocation2 + $0x50] sm:$0xff]
          %v900 = vld [vmem:[#allocation2 + $0x58] sm:$0xff]
          %v901 = vld [vmem:[#allocation2 + $0x60] sm:$0xff]
          %v902 = vld [vmem:[#allocation2 + $0x68] sm:$0xff]
          %v903 = vld [vmem:[#allocation2 + $0x70] sm:$0xff]
          %v904 = vld [vmem:[#allocation2 + $0x78] sm:$0xff]
          %v905 = vld [vmem:[%s4] sm:$0x1]
          %v907 = vlaneseq
          %v908 = vshrl.u32 %v907, 7
          %v909 = vsub.s32 0, %v908
          %v910 = vrot.slane %v905, %v909
          %v912 = vadd.f32 %v889, %v910
          %v913 = vadd.f32 %v890, %v910
          %v914 = vadd.f32 %v891, %v910
          %v915 = vadd.f32 %v892, %v910
          %v916 = vadd.f32 %v893, %v910
          %v917 = vadd.f32 %v894, %v910
          %v918 = vadd.f32 %v895, %v910
          %v919 = vadd.f32 %v896, %v910
          %v920 = vadd.f32 %v897, %v910
          %v921 = vadd.f32 %v898, %v910
          %v922 = vadd.f32 %v899, %v910
          %v923 = vadd.f32 %v900, %v910
          %v924 = vadd.f32 %v901, %v910
          %v925 = vadd.f32 %v902, %v910
          %v926 = vadd.f32 %v903, %v910
          %v927 = vadd.f32 %v904, %v910
          %928 = vst [vmem:[%s397] sm:$0xff] %v912
          %929 = vst [vmem:[%s397 + $0x8] sm:$0xff] %v913
          %930 = vst [vmem:[%s397 + $0x10] sm:$0xff] %v914
          %931 = vst [vmem:[%s397 + $0x18] sm:$0xff] %v915
          %932 = vst [vmem:[%s397 + $0x20] sm:$0xff] %v916
          %933 = vst [vmem:[%s397 + $0x28] sm:$0xff] %v917
          %934 = vst [vmem:[%s397 + $0x30] sm:$0xff] %v918
          %935 = vst [vmem:[%s397 + $0x38] sm:$0xff] %v919
          %936 = vst [vmem:[%s397 + $0x40] sm:$0xff] %v920
          %937 = vst [vmem:[%s397 + $0x48] sm:$0xff] %v921
          %938 = vst [vmem:[%s397 + $0x50] sm:$0xff] %v922
          %939 = vst [vmem:[%s397 + $0x58] sm:$0xff] %v923
          %940 = vst [vmem:[%s397 + $0x60] sm:$0xff] %v924
          %941 = vst [vmem:[%s397 + $0x68] sm:$0xff] %v925
          %942 = vst [vmem:[%s397 + $0x70] sm:$0xff] %v926
          %943 = vst [vmem:[%s397 + $0x78] sm:$0xff] %v927
        $region89: #{positionwise_feed_forward.1} parent=76 // pred_fallthru
          _
        %s944 = smul.u32 16, %s20
        %p945 = scmp.lt.s32.totalorder %s944, 31
        %s946 = scalar_select %p945, %s944, 31
        %s947 = smul.addr %s946, 8
        %s948 = scalar_lea.vmem %s5, %s947
        // Predicated region
        $region90: #{positionwise_feed_forward.1} parent=76 // pred_check
          %p949 = pneg %p171
        $region91: #{positionwise_feed_forward.1} parent=76 // pred_check_branch
          %951 = sbr.rel (%p949) target = $region93
        $region92: #{positionwise_feed_forward.1} parent=76 // pred_region
          %s952 = smul.u32 16, %s20
        $region93: #{positionwise_feed_forward.1} parent=76 // pred_fallthru
          _
      $region77: #{positionwise_feed_forward.1} parent=5 // pred_fallthru
        _
      %p953 = scmp.le.s32.totalorder 2, %s11
      // Predicated region
      $region94: #{positionwise_feed_forward.1} parent=5 // pred_check
        %p954 = pneg %p953
      $region95: #{positionwise_feed_forward.1} parent=5 // pred_check_branch
        %956 = sbr.rel (%p954) target = $region97
      $region96: #{positionwise_feed_forward.1} parent=5 // pred_region
        %s957 = ssub.s32 %s11, 2
        // Predicated region
        $region98: #{positionwise_feed_forward.1} parent=96 // pred_check
          %p958 = pneg %p177
        $region99: #{positionwise_feed_forward.1} parent=96 // pred_check_branch
          %960 = sbr.rel (%p958) target = $region101
        $region100: #{positionwise_feed_forward.1} parent=96 // pred_region
          %s961 = smul.u32 16, %s22
          %p962 = scmp.lt.s32.totalorder %s961, 31
          %s963 = scalar_select %p962, %s961, 31
          %s964 = smul.addr %s963, 8
          %s965 = scalar_lea.vmem %s5, %s964
        $region101: #{positionwise_feed_forward.1} parent=96 // pred_fallthru
          _
      $region97: #{positionwise_feed_forward.1} parent=5 // pred_fallthru
        _
    $region6: #{positionwise_feed_forward.1} parent=1 // loop_footer
      %s15 = sadd.s32 1, %s11
    $region7: #{positionwise_feed_forward.1} parent=1 // loop_footer_branch
      %10 = sbr.rel target = $region3
    $region8: #{positionwise_feed_forward.1} parent=1 // loop_exit
      _

</llo_original>
